<compile_context>
chip_gen: v7x
topology: tpu7x:2x2x1
jax: 0.10.0
libtpu: 0.0.40
codegen_flags: <defaults>
</compile_context>

<pallas_src>
import functools
import types

import jax
import jax.numpy as jnp
from jax import lax
from jax.experimental import pallas as pl
from jax.experimental.pallas import tpu as pltpu


_MIB = 1024 * 1024
_HEADROOM_BYTES = 4 * _MIB      # compiler scratch / partial-sum outputs / misc


def _round_up(x, m):
    return (x + m - 1) // m * m


def _vmem_limit_bytes():
    """Per-generation scoped-VMEM budget for these kernels."""
    phys = 64 * _MIB                             # conservative default (v7x/TC)
    try:
        info = pltpu.get_tpu_info()
        phys = int(getattr(info, "vmem_capacity_bytes", phys))
    except Exception:
        pass
    if phys <= 64 * _MIB:
        return 48 * _MIB                         # v7x: 64 MiB/TC, both TCs busy
    return 100 * _MIB                            # v5e / v6e: 128 MiB physical


def _pick_stripe(n_rows, per_row_bytes, resident_bytes, vmem_limit, *,
                 max_tile=None, row_multiple=8):
    """Largest row-stripe (multiple of row_multiple) fitting the VMEM budget.

    per_row_bytes must already include double-buffering of every streamed
    input; resident_bytes covers blocks whose index_map is constant.
    """
    budget = vmem_limit - resident_bytes - _HEADROOM_BYTES
    tile = max(budget // per_row_bytes, row_multiple)
    tile = max((tile // row_multiple) * row_multiple, row_multiple)
    tile = min(tile, _round_up(n_rows, row_multiple))
    if max_tile is not None:
        tile = min(tile, max((max_tile // row_multiple) * row_multiple,
                             row_multiple))
    return int(tile)


# --------------------------------------------------------------------------
# trace(A^T L A): grid streams row stripes of L; alpha is VMEM-resident.
# --------------------------------------------------------------------------
def _trace_tile_kernel(lap_ref, alpha_ref, alpha_rows_ref, out_ref, *, n_rows):
    i = pl.program_id(0)
    tile = lap_ref.shape[0]

    # (L[rows, :] @ A): bf16 (or f32) MXU matmul with f32 accumulation.
    la = jnp.dot(lap_ref[...], alpha_ref[...],
                 preferred_element_type=jnp.float32)          # [tile, k] f32

    prod = alpha_rows_ref[...] * la                           # f32 elementwise

    # Mask the ragged last stripe: rows >= n_rows hold uninitialized VMEM.
    row_ids = i * tile + lax.broadcasted_iota(jnp.int32, prod.shape, 0)
    prod = jnp.where(row_ids < n_rows, prod, 0.0)

    out_ref[...] = jnp.full((8, 128), jnp.sum(prod), jnp.float32)


def _trace_reg(lap, alpha, *, max_tile=None):
    n = lap.shape[0]
    k = alpha.shape[1]
    lap_bytes = jnp.dtype(lap.dtype).itemsize
    vmem_limit = _vmem_limit_bytes()

    k_lanes = _round_up(k, 128)
    resident = 2 * _round_up(n, 8) * k_lanes * lap_bytes       # resident alpha
    per_row = 2 * _round_up(n, 128) * lap_bytes + 2 * k_lanes * 4
    tile = _pick_stripe(n, per_row, resident, vmem_limit,
                        max_tile=max_tile,
                        row_multiple=16 if lap_bytes < 4 else 8)
    num_tiles = -(-n // tile)

    partials = pl.pallas_call(
        functools.partial(_trace_tile_kernel, n_rows=n),
        grid=(num_tiles,),
        in_specs=[
            pl.BlockSpec((tile, n), lambda i: (i, 0)),   # L row stripe (streamed)
            pl.BlockSpec((n, k), lambda i: (0, 0)),      # alpha (VMEM resident)
            pl.BlockSpec((tile, k), lambda i: (i, 0)),   # alpha row stripe (f32)
        ],
        out_specs=pl.BlockSpec((8, 128), lambda i: (i, 0)),
        out_shape=jax.ShapeDtypeStruct((num_tiles * 8, 128), jnp.float32),
        compiler_params=pltpu.CompilerParams(
            dimension_semantics=("parallel",),
            vmem_limit_bytes=vmem_limit),
    )(lap, alpha.astype(lap.dtype), alpha)
    return jnp.sum(partials[::8, 0])


# --------------------------------------------------------------------------
# ||target - prediction||_F^2: row-striped elementwise reduce (no padding).
# --------------------------------------------------------------------------
def _fro_tile_kernel(t_ref, p_ref, out_ref, *, n_rows):
    i = pl.program_id(0)
    tile = t_ref.shape[0]
    d = t_ref[...].astype(jnp.float32) - p_ref[...].astype(jnp.float32)
    sq = d * d
    row_ids = i * tile + lax.broadcasted_iota(jnp.int32, sq.shape, 0)
    sq = jnp.where(row_ids < n_rows, sq, 0.0)
    out_ref[...] = jnp.full((8, 128), jnp.sum(sq), jnp.float32)


def _fro_sq(target, prediction, *, max_tile=None):
    n_r, n_c = target.shape
    vmem_limit = _vmem_limit_bytes()
    per_row = 2 * 2 * _round_up(n_c, 128) * 4      # 2 streams, double-buffered
    tile = _pick_stripe(n_r, per_row, 0, vmem_limit,
                        max_tile=max_tile, row_multiple=8)
    num_tiles = -(-n_r // tile)

    partials = pl.pallas_call(
        functools.partial(_fro_tile_kernel, n_rows=n_r),
        grid=(num_tiles,),
        in_specs=[
            pl.BlockSpec((tile, n_c), lambda i: (i, 0)),
            pl.BlockSpec((tile, n_c), lambda i: (i, 0)),
        ],
        out_specs=pl.BlockSpec((8, 128), lambda i: (i, 0)),
        out_shape=jax.ShapeDtypeStruct((num_tiles * 8, 128), jnp.float32),
        compiler_params=pltpu.CompilerParams(
            dimension_semantics=("parallel",),
            vmem_limit_bytes=vmem_limit),
    )(target, prediction)
    return jnp.sum(partials[::8, 0])


# --------------------------------------------------------------------------
# Public entry: Pallas equivalent of Myloss.forward (returns scalar f32).
# --------------------------------------------------------------------------
def myloss_pallas(target, prediction, drug_lap, target_lap, alpha1, alpha2,
                  sizes, *, lap_dtype=jnp.bfloat16, max_tile=None):
    """lap_dtype: streaming dtype of the Laplacians (bf16 halves HBM bytes of
    the dominant term; supply bf16 Laplacians directly to avoid the one-off
    cast pass).  Use lap_dtype=jnp.float32 / None to stream them untouched."""
    target = target.astype(jnp.float32)
    prediction = prediction.astype(jnp.float32)
    alpha1 = alpha1.astype(jnp.float32)
    alpha2 = alpha2.astype(jnp.float32)
    if lap_dtype is not None:
        drug_lap = drug_lap.astype(lap_dtype)
        target_lap = target_lap.astype(lap_dtype)

    loss_ls = _fro_sq(target, prediction, max_tile=max_tile)
    drug_reg = _trace_reg(drug_lap, alpha1, max_tile=max_tile)
    target_reg = _trace_reg(target_lap, alpha2, max_tile=max_tile)

    # Lambda scaling + final scalar sum are trivial; done in the wrapper.
    return loss_ls + sizes.lambda1 * drug_reg + sizes.lambda2 * target_reg


def myloss_ref(target, prediction, drug_lap, target_lap, alpha1, alpha2, sizes):
    """Pure-JAX f32 reference matching the PyTorch module."""
    loss_ls = jnp.sum((target - prediction) ** 2)
    drug_reg = jnp.trace(alpha1.T @ drug_lap @ alpha1)
    target_reg = jnp.trace(alpha2.T @ target_lap @ alpha2)
    return loss_ls + sizes.lambda1 * drug_reg + sizes.lambda2 * target_reg


if __name__ == "__main__":
    key = jax.random.PRNGKey(0)
    k_t, k_p, k_dl, k_tl, k_a1, k_a2 = jax.random.split(key, 6)

    # Small but non-trivial shapes; max_tile=16 gives multi-stripe grids with
    # ragged last stripes (40 -> 3 stripes, 72 -> 5 stripes), exercising the
    # in-kernel row masking that replaced jnp.pad of the Laplacians.
    n_drug, n_target, k = 40, 72, 8

    target = jax.random.normal(k_t, (n_drug, n_target), dtype=jnp.float32)
    prediction = jax.random.normal(k_p, (n_drug, n_target), dtype=jnp.float32)

    dl = jax.random.normal(k_dl, (n_drug, n_drug), dtype=jnp.float32)
    drug_lap = dl + dl.T
    tl = jax.random.normal(k_tl, (n_target, n_target), dtype=jnp.float32)
    target_lap = tl + tl.T

    alpha1 = jax.random.normal(k_a1, (n_drug, k), dtype=jnp.float32)
    alpha2 = jax.random.normal(k_a2, (n_target, k), dtype=jnp.float32)

    sizes = types.SimpleNamespace(lambda1=0.5, lambda2=0.25)

    ref = myloss_ref(target, prediction, drug_lap, target_lap,
                     alpha1, alpha2, sizes)

    # f32 streaming path (tight tolerance, ragged stripes exercised).
    out_f32 = myloss_pallas(target, prediction, drug_lap, target_lap,
                            alpha1, alpha2, sizes,
                            lap_dtype=jnp.float32, max_tile=16)
    out_f32 = jax.block_until_ready(out_f32)
    assert jnp.allclose(out_f32, ref, rtol=1e-4, atol=1e-2), (out_f32, ref)

    # Default bf16 streaming path (loose tolerance: bf16 Laplacian mantissa).
    out_bf16 = myloss_pallas(target, prediction, drug_lap, target_lap,
                             alpha1, alpha2, sizes, max_tile=16)
    out_bf16 = jax.block_until_ready(out_bf16)
    assert jnp.allclose(out_bf16, ref, rtol=1e-2, atol=5.0), (out_bf16, ref)

    # VMEM-budget-derived stripes (single stripe at these small shapes).
    out_def = myloss_pallas(target, prediction, drug_lap, target_lap,
                            alpha1, alpha2, sizes)
    out_def = jax.block_until_ready(out_def)
    assert jnp.allclose(out_def, ref, rtol=1e-2, atol=5.0), (out_def, ref)

    print("KERNEL_OK")
</pallas_src>

<mosaic_0001>
module attributes {stable_mosaic.version = 11 : i64} {
  func.func @_fro_tile_kernel(%arg0: i32, %arg1: memref<16x72xf32, #tpu.memory_space<vmem>>, %arg2: memref<16x72xf32, #tpu.memory_space<vmem>>, %arg3: memref<8x128xf32, #tpu.memory_space<vmem>>) attributes {dimension_semantics = [#tpu.dimension_semantics<parallel>], iteration_bounds = array<i64: 3>, scalar_prefetch = 0 : i64, scratch_operands = 0 : i64, tpu.core_type = #tpu.core_type<tc>, window_params = [{transform_indices = @transform_0, window_bounds = array<i64: 16, 72>}, {transform_indices = @transform_1, window_bounds = array<i64: 16, 72>}, {transform_indices = @transform_2, window_bounds = array<i64: 8, 128>}]} {
    %c0 = arith.constant 0 : index
    %c0_0 = arith.constant 0 : index
    %0 = vector.load %arg1[%c0, %c0_0] : memref<16x72xf32, #tpu.memory_space<vmem>>, vector<16x72xf32>
    %c0_1 = arith.constant 0 : index
    %c0_2 = arith.constant 0 : index
    %1 = vector.load %arg2[%c0_1, %c0_2] : memref<16x72xf32, #tpu.memory_space<vmem>>, vector<16x72xf32>
    %2 = arith.subf %0, %1 : vector<16x72xf32>
    %3 = arith.mulf %2, %2 : vector<16x72xf32>
    %c16_i32 = arith.constant 16 : i32
    %4 = arith.muli %arg0, %c16_i32 : i32
    %5 = tpu.iota {dimensions = array<i32: 0>} : vector<16x72xi32>
    %6 = vector.broadcast %4 : i32 to vector<16x72xi32>
    %7 = arith.addi %6, %5 : vector<16x72xi32>
    %c40_i32 = arith.constant 40 : i32
    %8 = vector.broadcast %c40_i32 : i32 to vector<16x72xi32>
    %9 = arith.cmpi slt, %7, %8 : vector<16x72xi32>
    %cst = arith.constant 0.000000e+00 : f32
    %10 = vector.broadcast %cst : f32 to vector<16x72xf32>
    %11 = arith.select %9, %3, %10 : vector<16x72xi1>, vector<16x72xf32>
    %12 = vector.shape_cast %11 : vector<16x72xf32> to vector<1x16x72xf32>
    %cst_3 = arith.constant dense<0.000000e+00> : vector<1xf32>
    %13 = vector.multi_reduction <add>, %12, %cst_3 [1, 2] : vector<1x16x72xf32> to vector<1xf32>
    %14 = vector.shape_cast %13 : vector<1xf32> to vector<1x1x1xf32>
    %15 = vector.extract %14[0, 0, 0] : f32 from vector<1x1x1xf32>
    %16 = vector.broadcast %15 : f32 to vector<8x128xf32>
    %c0_4 = arith.constant 0 : index
    %c0_5 = arith.constant 0 : index
    %17 = vector.load %arg3[%c0_4, %c0_5] : memref<8x128xf32, #tpu.memory_space<vmem>>, vector<8x128xf32>
    tpu.vector_store %arg3[%c0_4, %c0_5], %16 {strides = array<i32>} : memref<8x128xf32, #tpu.memory_space<vmem>>, vector<8x128xf32>,
    return
  }
  func.func @transform_0(%arg0: i32) -> (i32, i32) {
    %c0_i32 = arith.constant 0 : i32
    %c0_i32_0 = arith.constant 0 : i32
    return %arg0, %c0_i32 : i32, i32
  }
  func.func @transform_1(%arg0: i32) -> (i32, i32) {
    %c0_i32 = arith.constant 0 : i32
    %c0_i32_0 = arith.constant 0 : i32
    return %arg0, %c0_i32 : i32, i32
  }
  func.func @transform_2(%arg0: i32) -> (i32, i32) {
    %c0_i32 = arith.constant 0 : i32
    %c0_i32_0 = arith.constant 0 : i32
    return %arg0, %c0_i32 : i32, i32
  }
}

</mosaic_0001>

<llo_original>
// kernel: tpu_custom_call.1
$region0: #{tpu_custom_call.1}
  #allocation0 [shape = 'u32[]', space=smem, size = 0x4, offset = 0x4, fixed_abs, tag = 'smem constant byte address 0x4 - core index']
  #allocation1 [shape = 'u32[144,128]{1,0:T(1,128)}', space=vmem, size = 0x12000, scoped, tag = 'internal scratch']
  %s0 = inlined_call_operand.hbm [shape: f32[40,72], index: 0, kind: input, shape index: {}]
  %s1 = inlined_call_operand.hbm [shape: f32[40,72], index: 1, kind: input, shape index: {}]
  %s2 = inlined_call_operand.hbm [shape: f32[24,128], index: 2, kind: output, shape index: {}]
  %s3 = sld [smem:[#allocation0]]
  $region49: #{tpu_custom_call.1} parent=0
    _
  %s5 = ssub.s32 1, %s3
  %s6 = scalar_select 0, %s5, %s3
  $region1: #{tpu_custom_call.1} parent=0
    #allocation2 [shape = 'u8[16384]{0}', space=vmem, size = 0x4000, scoped, tag = 'input window, operand 0']
    #allocation3 [shape = 's32[2]{0}', space=sflag, size = 0x8, scoped, tag = 'scoped memory for tpu_custom_call.1']
    #allocation4 [shape = 's32[2]{0}', space=sflag, size = 0x8, scoped, tag = 'scoped memory for tpu_custom_call.1']
    #allocation5 [shape = 'u8[16384]{0}', space=vmem, size = 0x4000, scoped, tag = 'input window, operand 1']
    #allocation6 [shape = 's32[2]{0}', space=sflag, size = 0x8, scoped, tag = 'scoped memory for tpu_custom_call.1']
    #allocation7 [shape = 'u8[8192]{0}', space=vmem, size = 0x2000, scoped, tag = 'output window, operand 0']
    %7 = vsyncpa [#allocation3], 0
    %s8 = scalar_lea.sflag [#allocation3], 1
    %9 = vsyncpa %s8, 0
    %10 = vsyncpa [#allocation6], 0
    %s11 = scalar_lea.sflag [#allocation6], 1
    %12 = vsyncpa %s11, 0
    %13 = vsyncpa [#allocation4], 0
    %s14 = scalar_lea.sflag [#allocation4], 1
    %15 = vsyncpa %s14, 0
    loop: start=0, step=1, limit=5
    $region2: #{tpu_custom_call.1} parent=1 // loop_pre_header
      _
    $region3: #{tpu_custom_call.1} parent=1 // loop_header
      %s17 = sphi 0, %s21
      %p18 = scmp.ge.s32.totalorder %s17, 5
      %s27 = sphi 0, %s29
      %s30 = sphi 0, %s27
      %s31 = sphi 0, %s30
      %s47 = sphi 0, %s31
      %s53 = sphi 0, %s55
      %s56 = sphi 0, %s53
      %s57 = sphi 0, %s56
      %s73 = sphi 0, %s57
      %s79 = sphi 0, %s81
      %s82 = sphi 0, %s79
      %s83 = sphi 0, %s82
      %s99 = sphi 0, %s83
    $region4: #{tpu_custom_call.1} parent=1 // loop_header_branch
      %20 = sbr.rel (%p18) target = $region8
    $region5: #{tpu_custom_call.1} parent=1 // loop_body
      %s22 = ssub.s32 %s17, 1
      %s23 = ssub.s32 %s17, 2
      %s24 = sadd.s32 %s17, 1
      %s25 = ssub.s32 %s17, %s24
      %p26 = scmp.eq.s32.totalorder %s25, 0
      %s28 = sadd.s32 %s27, 1
      %s29 = scalar_select %p26, %s27, %s28
      %p32 = pneg %p26
      %p33 = scmp.eq.s32.totalorder %s17, 2
      %p34 = por %p32, %p33
      %p35 = scmp.ne.s32.totalorder %s27, %s30
      %p36 = scmp.eq.s32.totalorder %s17, 0
      %p37 = por %p35, %p36
      %p38 = scmp.ne.s32.totalorder %s27, %s30
      %p39 = scmp.eq.s32.totalorder %s22, 2
      %p40 = por %p38, %p39
      %p41 = scmp.ne.s32.totalorder %s30, %s31
      %p42 = scmp.eq.s32.totalorder %s22, 0
      %p43 = por %p41, %p42
      %p44 = scmp.ne.s32.totalorder %s30, %s31
      %p45 = scmp.eq.s32.totalorder %s23, 2
      %p46 = por %p44, %p45
      %p48 = scmp.ne.s32.totalorder %s31, %s47
      %p49 = scmp.eq.s32.totalorder %s23, 0
      %p50 = por %p48, %p49
      %s51 = ssub.s32 %s17, %s24
      %p52 = scmp.eq.s32.totalorder %s51, 0
      %s54 = sadd.s32 %s53, 1
      %s55 = scalar_select %p52, %s53, %s54
      %p58 = pneg %p52
      %p59 = scmp.eq.s32.totalorder %s17, 2
      %p60 = por %p58, %p59
      %p61 = scmp.ne.s32.totalorder %s53, %s56
      %p62 = scmp.eq.s32.totalorder %s17, 0
      %p63 = por %p61, %p62
      %p64 = scmp.ne.s32.totalorder %s53, %s56
      %p65 = scmp.eq.s32.totalorder %s22, 2
      %p66 = por %p64, %p65
      %p67 = scmp.ne.s32.totalorder %s56, %s57
      %p68 = scmp.eq.s32.totalorder %s22, 0
      %p69 = por %p67, %p68
      %p70 = scmp.ne.s32.totalorder %s56, %s57
      %p71 = scmp.eq.s32.totalorder %s23, 2
      %p72 = por %p70, %p71
      %p74 = scmp.ne.s32.totalorder %s57, %s73
      %p75 = scmp.eq.s32.totalorder %s23, 0
      %p76 = por %p74, %p75
      %s77 = ssub.s32 %s17, %s24
      %p78 = scmp.eq.s32.totalorder %s77, 0
      %s80 = sadd.s32 %s79, 1
      %s81 = scalar_select %p78, %s79, %s80
      %p84 = pneg %p78
      %p85 = scmp.eq.s32.totalorder %s17, 2
      %p86 = por %p84, %p85
      %p87 = scmp.ne.s32.totalorder %s79, %s82
      %p88 = scmp.eq.s32.totalorder %s17, 0
      %p89 = por %p87, %p88
      %p90 = scmp.ne.s32.totalorder %s79, %s82
      %p91 = scmp.eq.s32.totalorder %s22, 2
      %p92 = por %p90, %p91
      %p93 = scmp.ne.s32.totalorder %s82, %s83
      %p94 = scmp.eq.s32.totalorder %s22, 0
      %p95 = por %p93, %p94
      %p96 = scmp.ne.s32.totalorder %s82, %s83
      %p97 = scmp.eq.s32.totalorder %s23, 2
      %p98 = por %p96, %p97
      %p100 = scmp.ne.s32.totalorder %s83, %s99
      %p101 = scmp.eq.s32.totalorder %s23, 0
      %p102 = por %p100, %p101
      %p103 = scmp.le.s32.totalorder 1, %s17
      %p104 = scmp.lt.s32.totalorder %s17, 4
      %p105 = pnand %p103, %p104
      %p106 = pneg %p105
      // Predicated region
      $region9: #{tpu_custom_call.1} parent=5 // pred_check
        _
      $region10: #{tpu_custom_call.1} parent=5 // pred_check_branch
        %108 = sbr.rel (%p105) target = $region12
      $region11: #{tpu_custom_call.1} parent=5 // pred_region
        %s109 = ssub.s32 %s17, 1
      $region12: #{tpu_custom_call.1} parent=5 // pred_fallthru
        _
      %p110 = scmp.lt.s32.totalorder %s17, 3
      // Predicated region
      $region13: #{tpu_custom_call.1} parent=5 // pred_check
        %p111 = pneg %p110
      $region14: #{tpu_custom_call.1} parent=5 // pred_check_branch
        %113 = sbr.rel (%p111) target = $region16
      $region15: #{tpu_custom_call.1} parent=5 // pred_region
        // Predicated region
        $region17: #{tpu_custom_call.1} parent=15 // pred_check
          %p114 = pneg %p37
        $region18: #{tpu_custom_call.1} parent=15 // pred_check_branch
          %116 = sbr.rel (%p114) target = $region20
        $region19: #{tpu_custom_call.1} parent=15 // pred_region
          %s117 = sand.u32 %s27, 1
          %s118 = scalar_lea.sflag [#allocation3], %s117
          %s119 = sand.u32 %s27, 1
          %s120 = smul.addr %s119, 16
          %s121 = scalar_lea.vmem [#allocation2], %s120
          %s122 = smul.u32 2, %s17
          %s123 = ssub.s32 5, %s122
          %p124 = scmp.lt.s32.totalorder %s123, 2
          %s125 = scalar_select %p124, %s123, 2
          %s126 = smul.u32 128, %s125
          %s128 = ssub.s32 256, %s126
          %129 = vsyncadd %s118, %s128
          %p130 = scmp.ne.s32.totalorder 0, %s126
          %s131 = smul.addr %s122, 128
          %s132 = scalar_lea.hbm %s0, %s131
          %s133 = smul.u32 8, %s125
          %s134 = sshll.u32 %s121, 4
          %s135 = int_to_ptr.vmem [resolvable:$true] %s134
          %s136 = sshll.u32 %s133, 4
          %140 = dma.hbm_to_vmem [thread:$0]  (%p130), %s132, %s136, %s135, %s118, 128, 128, 8
        $region20: #{tpu_custom_call.1} parent=15 // pred_fallthru
          _
        // Predicated region
        $region21: #{tpu_custom_call.1} parent=15 // pred_check
          %p141 = pneg %p63
        $region22: #{tpu_custom_call.1} parent=15 // pred_check_branch
          %143 = sbr.rel (%p141) target = $region24
        $region23: #{tpu_custom_call.1} parent=15 // pred_region
          %s144 = sand.u32 %s53, 1
          %s145 = scalar_lea.sflag [#allocation6], %s144
          %s146 = sand.u32 %s53, 1
          %s147 = smul.addr %s146, 16
          %s148 = scalar_lea.vmem [#allocation5], %s147
          %s149 = smul.u32 2, %s17
          %s150 = ssub.s32 5, %s149
          %p151 = scmp.lt.s32.totalorder %s150, 2
          %s152 = scalar_select %p151, %s150, 2
          %s153 = smul.u32 128, %s152
          %s155 = ssub.s32 256, %s153
          %156 = vsyncadd %s145, %s155
          %p157 = scmp.ne.s32.totalorder 0, %s153
          %s158 = smul.addr %s149, 128
          %s159 = scalar_lea.hbm %s1, %s158
          %s160 = smul.u32 8, %s152
          %s161 = sshll.u32 %s148, 4
          %s162 = int_to_ptr.vmem [resolvable:$true] %s161
          %s163 = sshll.u32 %s160, 4
          %167 = dma.hbm_to_vmem [thread:$0]  (%p157), %s159, %s163, %s162, %s145, 128, 128, 8
        $region24: #{tpu_custom_call.1} parent=15 // pred_fallthru
          _
      $region16: #{tpu_custom_call.1} parent=5 // pred_fallthru
        _
      %p168 = scmp.le.s32.totalorder 1, %s17
      %p169 = scmp.lt.s32.totalorder %s17, 4
      %p170 = pnand %p168, %p169
      %p171 = pneg %p170
      // Predicated region
      $region25: #{tpu_custom_call.1} parent=5 // pred_check
        _
      $region26: #{tpu_custom_call.1} parent=5 // pred_check_branch
        %173 = sbr.rel (%p170) target = $region28
      $region27: #{tpu_custom_call.1} parent=5 // pred_region
        %s174 = ssub.s32 %s17, 1
        %s175 = sand.u32 %s30, 1
        %s176 = scalar_lea.sflag [#allocation3], %s175
        %s177 = sand.u32 %s30, 1
        %s178 = smul.addr %s177, 16
        %s179 = scalar_lea.vmem [#allocation2], %s178
        // Predicated region
        $region29: #{tpu_custom_call.1} parent=27 // pred_check
          %p180 = pneg %p43
        $region30: #{tpu_custom_call.1} parent=27 // pred_check_branch
          %182 = sbr.rel (%p180) target = $region32
        $region31: #{tpu_custom_call.1} parent=27 // pred_region
          %183 = dma.done %s176, 256
        $region32: #{tpu_custom_call.1} parent=27 // pred_fallthru
          _
        %s184 = sand.u32 %s56, 1
        %s185 = scalar_lea.sflag [#allocation6], %s184
        %s186 = sand.u32 %s56, 1
        %s187 = smul.addr %s186, 16
        %s188 = scalar_lea.vmem [#allocation5], %s187
        // Predicated region
        $region33: #{tpu_custom_call.1} parent=27 // pred_check
          %p189 = pneg %p69
        $region34: #{tpu_custom_call.1} parent=27 // pred_check_branch
          %191 = sbr.rel (%p189) target = $region36
        $region35: #{tpu_custom_call.1} parent=27 // pred_region
          %192 = dma.done %s185, 256
        $region36: #{tpu_custom_call.1} parent=27 // pred_fallthru
          _
        %s193 = sand.u32 %s30, 1
        %s194 = scalar_lea.sflag [#allocation3], %s193
        %s195 = sand.u32 %s30, 1
        %s196 = smul.addr %s195, 16
        %s197 = scalar_lea.vmem [#allocation2], %s196
        %p198 = pneg %p43
        %p199 = pneg %p40
        %s200 = sand.u32 %s56, 1
        %s201 = scalar_lea.sflag [#allocation6], %s200
        %s202 = sand.u32 %s56, 1
        %s203 = smul.addr %s202, 16
        %s204 = scalar_lea.vmem [#allocation5], %s203
        %p205 = pneg %p69
        %p206 = pneg %p66
        %p207 = pneg %p95
        %p208 = pneg %p92
        %s209 = sand.u32 %s82, 1
        %s210 = scalar_lea.sflag [#allocation4], %s209
        %s211 = sand.u32 %s82, 1
        %s212 = smul.addr %s211, 8
        %s213 = scalar_lea.vmem [#allocation7], %s212
        %s214 = smul.u32 2, %s22
        %s215 = ssub.s32 5, %s214
        %p216 = scmp.lt.s32.totalorder %s215, 2
        %s217 = scalar_select %p216, %s215, 2
        %s218 = smul.u32 128, %s217
        %s219 = smul.u32 2, %s22
        %s220 = ssub.s32 5, %s219
        %p221 = scmp.lt.s32.totalorder %s220, 2
        %s222 = scalar_select %p221, %s220, 2
        %s223 = smul.u32 128, %s222
        %v224 = vld [vmem:[%s179] sm:$0xff]
        %v225 = vld [vmem:[%s179 + $0x8] sm:$0xff]
        %v226 = vld [vmem:[%s188] sm:$0xff]
        %v227 = vld [vmem:[%s188 + $0x8] sm:$0xff]
        %v228 = vsub.f32 %v224, %v226
        %v229 = vsub.f32 %v225, %v227
        %v230 = vmul.f32 %v228, %v228
        %v231 = vmul.f32 %v229, %v229
        %s232 = smul.u32 %s22, 16
        %v233 = vlaneseq
        %v234 = vshrl.u32 %v233, 7
        %v235 = vadd.s32 %v234, 8
        %v236 = vstv %s232
        %v237 = vadd.s32 %v236, %v234
        %v238 = vadd.s32 %v236, %v235
        %vm239 = vcmp.lt.s32.totalorder %v237, 40
        %vm240 = vcmp.lt.s32.totalorder %v238, 40
        %v241 = vsel %vm239, %v230, 0.0
        %v242 = vsel %vm240, %v231, 0.0
        %vm243 = vcmask 588800
        %v244 = vsel %vm243, %v241, 0.0
        %v245 = vsel %vm243, %v242, 0.0
        %v246 = vadd.f32 %v244, %v245
        %247 = vadd.xlane.f32.xlu0 %v246
        %v248 = vpop.xlane.xlu0 %247
        %v249 = vrot.slane %v248, 4
        %v250 = vadd.f32 %v248, %v249
        %v251 = vrot.slane %v250, 2
        %v252 = vadd.f32 %v250, %v251
        %v253 = vrot.slane %v252, 1
        %v254 = vadd.f32 %v252, %v253
        %s255 = vtos %v254
        %v256 = vstv %s255
        %257 = vst [vmem:[%s213] sm:$0xff] %v256
        %s258 = sand.u32 %s82, 1
        %s259 = scalar_lea.sflag [#allocation4], %s258
        %s260 = sand.u32 %s82, 1
        %s261 = smul.addr %s260, 8
        %s262 = scalar_lea.vmem [#allocation7], %s261
        // Predicated region
        $region37: #{tpu_custom_call.1} parent=27 // pred_check
          %p263 = pneg %p92
        $region38: #{tpu_custom_call.1} parent=27 // pred_check_branch
          %265 = sbr.rel (%p263) target = $region40
        $region39: #{tpu_custom_call.1} parent=27 // pred_region
          %s267 = ssub.s32 128, 128
          %268 = vsyncadd %s259, %s267
          %s269 = smul.addr %s22, 128
          %s270 = scalar_lea.hbm %s2, %s269
          %s272 = sshll.u32 %s262, 4
          %s273 = int_to_ptr.vmem [resolvable:$true] %s272
          %275 = dma.vmem_to_hbm [thread:$0]  %s273, 128, %s270, %s259
        $region40: #{tpu_custom_call.1} parent=27 // pred_fallthru
          _
      $region28: #{tpu_custom_call.1} parent=5 // pred_fallthru
        _
      %p276 = scmp.le.s32.totalorder 2, %s17
      // Predicated region
      $region41: #{tpu_custom_call.1} parent=5 // pred_check
        %p277 = pneg %p276
      $region42: #{tpu_custom_call.1} parent=5 // pred_check_branch
        %279 = sbr.rel (%p277) target = $region44
      $region43: #{tpu_custom_call.1} parent=5 // pred_region
        %s280 = ssub.s32 %s17, 2
        // Predicated region
        $region45: #{tpu_custom_call.1} parent=43 // pred_check
          %p281 = pneg %p98
        $region46: #{tpu_custom_call.1} parent=43 // pred_check_branch
          %283 = sbr.rel (%p281) target = $region48
        $region47: #{tpu_custom_call.1} parent=43 // pred_region
          %s284 = sand.u32 %s83, 1
          %s285 = scalar_lea.sflag [#allocation4], %s284
          %s286 = sand.u32 %s83, 1
          %s287 = smul.addr %s286, 8
          %s288 = scalar_lea.vmem [#allocation7], %s287
          %289 = dma.done %s285, 128
        $region48: #{tpu_custom_call.1} parent=43 // pred_fallthru
          _
      $region44: #{tpu_custom_call.1} parent=5 // pred_fallthru
        _
    $region6: #{tpu_custom_call.1} parent=1 // loop_footer
      %s21 = sadd.s32 1, %s17
    $region7: #{tpu_custom_call.1} parent=1 // loop_footer_branch
      %16 = sbr.rel target = $region3
    $region8: #{tpu_custom_call.1} parent=1 // loop_exit
      _
    %290 = vsyncpa [#allocation3], 1
    %s291 = scalar_lea.sflag [#allocation3], 1
    %292 = vsyncpa %s291, 1
    %293 = vsyncpa [#allocation6], 1
    %s294 = scalar_lea.sflag [#allocation6], 1
    %295 = vsyncpa %s294, 1
    %296 = vsyncpa [#allocation4], 1
    %s297 = scalar_lea.sflag [#allocation4], 1
    %298 = vsyncpa %s297, 1

</llo_original>
